<compile_context>
chip_gen: v5e
topology: v5e:2x2
jax: 0.10.0
libtpu: 0.0.40
codegen_flags: <defaults>
</compile_context>

<pallas_src>
import math

import jax
import jax.numpy as jnp
from jax.experimental import pallas as pl
from jax.experimental.pallas import tpu as pltpu


# ---------------------------------------------------------------------------
# Kernel: fused QKV projection + masked softmax self-attention
#   q,k,v = f @ [Wq^T | Wk^T | Wv^T]
#   attn  = softmax(mask_fill(q * D^-0.5 @ k^T, mask, -1e9))
#   out   = attn @ v
# ---------------------------------------------------------------------------
def _encoder_layer_kernel(f_ref, mask_ref, wqkv_ref, o_ref):
    f = f_ref[...]                                             # [BB, S, D]
    bb, s, d = f.shape

    # Fused QKV: one [BB*S, D] x [D, 3D] MXU matmul (lane-dense N = 3*D).
    qkv = jnp.dot(f.reshape(bb * s, d), wqkv_ref[...],
                  preferred_element_type=jnp.float32)          # [BB*S, 3D]
    q = qkv[:, 0 * d:1 * d].reshape(bb, s, d)                  # 128-aligned slices
    k = qkv[:, 1 * d:2 * d].reshape(bb, s, d)
    v = qkv[:, 2 * d:3 * d].reshape(bb, s, d)

    scale = jnp.float32(d ** -0.5)
    scores = jnp.einsum('bqe,bke->bqk', q * scale, k,
                        preferred_element_type=jnp.float32)    # [BB, S, S]

    pad = mask_ref[...] != 0                                   # [BB, 1, S]
    scores = jnp.where(pad, jnp.float32(-1e9), scores)         # masked_fill

    m = jnp.max(scores, axis=-1, keepdims=True)
    e = jnp.exp(scores - m)
    denom = jnp.sum(e, axis=-1, keepdims=True)
    attn = e * pl.reciprocal(denom, approx=True)               # EUP, not VPU divide

    out = jnp.einsum('bqk,bke->bqe', attn, v,
                     preferred_element_type=jnp.float32)       # [BB, S, D]
    o_ref[...] = out.astype(o_ref.dtype)


# ---------------------------------------------------------------------------
# Wrapper
# ---------------------------------------------------------------------------
def transformer_encoder_layer(features, mask, w_q, w_k, w_v, *, block_batch=None):
    """Forward of TransformerEncoderLayer with component=['w_v'].

    features : [B, S, D] float32
    mask     : [B, S] bool/int; nonzero == masked-out key position
    w_q/w_k/w_v : torch nn.Linear weight layout [D_out, D_in]; y = x @ W.T
    """
    B, S, D = features.shape
    if block_batch is None:
        block_batch = min(B, 4)
    while B % block_batch:
        block_batch -= 1

    # Fuse the three projections into a single [D, 3D] weight.
    wqkv = jnp.concatenate([w_q.T, w_k.T, w_v.T], axis=1).astype(jnp.float32)
    mask_b = mask.astype(jnp.int32).reshape(B, 1, S)

    grid = (B // block_batch,)
    return pl.pallas_call(
        _encoder_layer_kernel,
        out_shape=jax.ShapeDtypeStruct((B, S, D), features.dtype),
        grid=grid,
        in_specs=[
            pl.BlockSpec((block_batch, S, D), lambda i: (i, 0, 0)),   # features
            pl.BlockSpec((block_batch, 1, S), lambda i: (i, 0, 0)),   # mask
            pl.BlockSpec((D, 3 * D), lambda i: (0, 0)),               # fused QKV weight
        ],
        out_specs=pl.BlockSpec((block_batch, S, D), lambda i: (i, 0, 0)),
        compiler_params=pltpu.CompilerParams(
            dimension_semantics=("parallel",)),   # v7x: batch tiles split over 2 TCs
    )(features, mask_b, wqkv)


# ---------------------------------------------------------------------------
# Pure-JAX reference (mirrors the PyTorch forward) for a silent correctness check
# ---------------------------------------------------------------------------
def _reference(features, mask, w_q, w_k, w_v):
    d = features.shape[-1]
    q = features @ w_q.T
    k = features @ w_k.T
    v = features @ w_v.T
    attn = (q * (d ** -0.5)) @ jnp.swapaxes(k, -1, -2)
    attn = jnp.where(mask[:, None, :], -1e9, attn)
    attn = jax.nn.softmax(attn, axis=-1)
    return attn @ v


# ---------------------------------------------------------------------------
if __name__ == "__main__":
    BATCH, SEQ_LEN, EMBED_DIM = 8, 8, 128

    key = jax.random.PRNGKey(0)
    k_f, k_q, k_k, k_v, k_len = jax.random.split(key, 5)

    xav = math.sqrt(2.0 / (EMBED_DIM + EMBED_DIM))             # xavier_normal_
    features = jax.random.normal(k_f, (BATCH, SEQ_LEN, EMBED_DIM), jnp.float32)
    w_q = jax.random.normal(k_q, (EMBED_DIM, EMBED_DIM), jnp.float32) * xav
    w_k = jax.random.normal(k_k, (EMBED_DIM, EMBED_DIM), jnp.float32) * xav
    w_v = jax.random.normal(k_v, (EMBED_DIM, EMBED_DIM), jnp.float32) * xav

    # padding mask: True for key positions past each sequence's length
    lens = jax.random.randint(k_len, (BATCH,), 3, SEQ_LEN + 1, dtype=jnp.int32)
    mask = jnp.arange(SEQ_LEN, dtype=jnp.int32)[None, :] >= lens[:, None]

    out = transformer_encoder_layer(features, mask, w_q, w_k, w_v)
    out = jax.block_until_ready(out)

    ref = _reference(features, mask, w_q, w_k, w_v)
    assert out.shape == (BATCH, SEQ_LEN, EMBED_DIM)
    assert bool(jnp.all(jnp.isfinite(out))), "non-finite output"
    assert bool(jnp.allclose(out, ref, rtol=1e-2, atol=1e-3)), "mismatch vs reference"
    print("KERNEL_OK")
</pallas_src>

<mosaic_0001>
module attributes {stable_mosaic.version = 11 : i64} {
  func.func @_encoder_layer_kernel(%arg0: i32, %arg1: memref<4x8x128xf32, #tpu.memory_space<vmem>>, %arg2: memref<4x1x8xi32, #tpu.memory_space<vmem>>, %arg3: memref<128x384xf32, #tpu.memory_space<vmem>>, %arg4: memref<4x8x128xf32, #tpu.memory_space<vmem>>) attributes {dimension_semantics = [#tpu.dimension_semantics<parallel>], iteration_bounds = array<i64: 2>, scalar_prefetch = 0 : i64, scratch_operands = 0 : i64, tpu.core_type = #tpu.core_type<tc>, window_params = [{transform_indices = @transform_0, window_bounds = array<i64: 4, 8, 128>}, {transform_indices = @transform_1, window_bounds = array<i64: 4, 1, 8>}, {pipeline_mode = #tpu.pipeline_mode<synchronous>, transform_indices = @transform_2, window_bounds = array<i64: 128, 384>}, {transform_indices = @transform_3, window_bounds = array<i64: 4, 8, 128>}]} {
    %c0 = arith.constant 0 : index
    %c0_0 = arith.constant 0 : index
    %c0_1 = arith.constant 0 : index
    %0 = vector.load %arg1[%c0, %c0_0, %c0_1] : memref<4x8x128xf32, #tpu.memory_space<vmem>>, vector<4x8x128xf32>
    %1 = vector.shape_cast %0 : vector<4x8x128xf32> to vector<32x128xf32>
    %c0_2 = arith.constant 0 : index
    %c0_3 = arith.constant 0 : index
    %2 = vector.load %arg3[%c0_2, %c0_3] : memref<128x384xf32, #tpu.memory_space<vmem>>, vector<128x384xf32>
    %cst = arith.constant dense<0.000000e+00> : vector<32x384xf32>
    %3 = tpu.matmul %1, %2, %cst {dimension_numbers = #tpu.dot_dimension_numbers<[1], [0], [0], [1], [0, 0, 1, 1], [], []>} : vector<32x128xf32>, vector<128x384xf32>, vector<32x384xf32> -> vector<32x384xf32>
    %4 = vector.extract_strided_slice %3 {offsets = [0, 0], sizes = [32, 128], strides = [1, 1]} : vector<32x384xf32> to vector<32x128xf32>
    %5 = vector.shape_cast %4 : vector<32x128xf32> to vector<4x8x128xf32>
    %6 = vector.extract_strided_slice %3 {offsets = [0, 128], sizes = [32, 128], strides = [1, 1]} : vector<32x384xf32> to vector<32x128xf32>
    %7 = vector.shape_cast %6 : vector<32x128xf32> to vector<4x8x128xf32>
    %8 = vector.extract_strided_slice %3 {offsets = [0, 256], sizes = [32, 128], strides = [1, 1]} : vector<32x384xf32> to vector<32x128xf32>
    %9 = vector.shape_cast %8 : vector<32x128xf32> to vector<4x8x128xf32>
    %cst_4 = arith.constant 0.0883883461 : f32
    %10 = vector.broadcast %cst_4 : f32 to vector<4x8x128xf32>
    %11 = arith.mulf %5, %10 : vector<4x8x128xf32>
    "tpu.trace_start"() <{level = 10 : i32, message = "bqe,bke->bqk"}> : () -> ()
    %cst_5 = arith.constant dense<0.000000e+00> : vector<4x8x8xf32>
    %12 = tpu.matmul %11, %7, %cst_5 {dimension_numbers = #tpu.dot_dimension_numbers<[2], [2], [1], [1], [0, 0, 0, 1, 1, 1], [0], [0]>} : vector<4x8x128xf32>, vector<4x8x128xf32>, vector<4x8x8xf32> -> vector<4x8x8xf32>
    "tpu.trace_stop"() : () -> ()
    %c0_6 = arith.constant 0 : index
    %c0_7 = arith.constant 0 : index
    %c0_8 = arith.constant 0 : index
    %13 = vector.load %arg2[%c0_6, %c0_7, %c0_8] : memref<4x1x8xi32, #tpu.memory_space<vmem>>, vector<4x1x8xi32>
    %c0_i32 = arith.constant 0 : i32
    %14 = vector.broadcast %c0_i32 : i32 to vector<4x1x8xi32>
    %15 = arith.cmpi ne, %13, %14 : vector<4x1x8xi32>
    %cst_9 = arith.constant -1.000000e+09 : f32
    %16 = vector.shape_cast %15 : vector<4x1x8xi1> to vector<4x1x8xi1>
    %17 = vector.broadcast %16 : vector<4x1x8xi1> to vector<4x8x8xi1>
    %18 = vector.broadcast %cst_9 : f32 to vector<4x8x8xf32>
    %19 = arith.select %17, %18, %12 : vector<4x8x8xi1>, vector<4x8x8xf32>
    %cst_10 = arith.constant dense<0xFF800000> : vector<4x8xf32>
    %20 = vector.multi_reduction <maximumf>, %19, %cst_10 [2] : vector<4x8x8xf32> to vector<4x8xf32>
    %21 = vector.shape_cast %20 : vector<4x8xf32> to vector<4x8x1xf32>
    %22 = vector.broadcast %21 : vector<4x8x1xf32> to vector<4x8x8xf32>
    %23 = arith.subf %19, %22 : vector<4x8x8xf32>
    %24 = math.exp %23 : vector<4x8x8xf32>
    %cst_11 = arith.constant dense<0.000000e+00> : vector<4x8xf32>
    %25 = vector.multi_reduction <add>, %24, %cst_11 [2] : vector<4x8x8xf32> to vector<4x8xf32>
    %26 = vector.shape_cast %25 : vector<4x8xf32> to vector<4x8x1xf32>
    %27 = tpu.reciprocal %26 {approx = true} : vector<4x8x1xf32> -> vector<4x8x1xf32>
    %28 = vector.broadcast %27 : vector<4x8x1xf32> to vector<4x8x8xf32>
    %29 = arith.mulf %24, %28 : vector<4x8x8xf32>
    "tpu.trace_start"() <{level = 10 : i32, message = "bqk,bke->bqe"}> : () -> ()
    %cst_12 = arith.constant dense<0.000000e+00> : vector<4x8x128xf32>
    %30 = tpu.matmul %29, %9, %cst_12 {dimension_numbers = #tpu.dot_dimension_numbers<[2], [1], [1], [2], [0, 0, 0, 1, 1, 2], [0], [0]>} : vector<4x8x8xf32>, vector<4x8x128xf32>, vector<4x8x128xf32> -> vector<4x8x128xf32>
    "tpu.trace_stop"() : () -> ()
    %c0_13 = arith.constant 0 : index
    %c0_14 = arith.constant 0 : index
    %c0_15 = arith.constant 0 : index
    %31 = vector.load %arg4[%c0_13, %c0_14, %c0_15] : memref<4x8x128xf32, #tpu.memory_space<vmem>>, vector<4x8x128xf32>
    tpu.vector_store %arg4[%c0_13, %c0_14, %c0_15], %30 {strides = array<i32>} : memref<4x8x128xf32, #tpu.memory_space<vmem>>, vector<4x8x128xf32>,
    return
  }
  func.func @transform_0(%arg0: i32) -> (i32, i32, i32) {
    %c0_i32 = arith.constant 0 : i32
    %c0_i32_0 = arith.constant 0 : i32
    %c0_i32_1 = arith.constant 0 : i32
    return %arg0, %c0_i32, %c0_i32_0 : i32, i32, i32
  }
  func.func @transform_1(%arg0: i32) -> (i32, i32, i32) {
    %c0_i32 = arith.constant 0 : i32
    %c0_i32_0 = arith.constant 0 : i32
    %c0_i32_1 = arith.constant 0 : i32
    return %arg0, %c0_i32, %c0_i32_0 : i32, i32, i32
  }
  func.func @transform_2(%arg0: i32) -> (i32, i32) {
    %c0_i32 = arith.constant 0 : i32
    %c0_i32_0 = arith.constant 0 : i32
    %c0_i32_1 = arith.constant 0 : i32
    return %c0_i32, %c0_i32_0 : i32, i32
  }
  func.func @transform_3(%arg0: i32) -> (i32, i32, i32) {
    %c0_i32 = arith.constant 0 : i32
    %c0_i32_0 = arith.constant 0 : i32
    %c0_i32_1 = arith.constant 0 : i32
    return %arg0, %c0_i32, %c0_i32_0 : i32, i32, i32
  }
}

</mosaic_0001>

<llo_original>
// kernel: tpu_custom_call.1
$region0: #{tpu_custom_call.1}
  #allocation0 [shape = 'u32[]', space=smem, size = 0x4, offset = 0x4, fixed_abs, tag = 'smem constant byte address 0x4 - core index']
  #allocation1 [shape = 'u32[72,128]{1,0:T(1,128)}', space=vmem, size = 0x9000, scoped, tag = 'internal scratch']
  %s0 = inlined_call_operand.hbm [shape: f32[8,8,128], index: 0, kind: input, shape index: {}]
  %s1 = inlined_call_operand.hbm [shape: s32[8,1,8], index: 1, kind: input, shape index: {}]
  %s2 = inlined_call_operand.hbm [shape: f32[128,384], index: 2, kind: input, shape index: {}]
  %s3 = inlined_call_operand.hbm [shape: f32[8,8,128], index: 3, kind: output, shape index: {}]
  %s4 = sld [smem:[#allocation0]]
  $region57: #{tpu_custom_call.1} parent=0
    _
  %s6 = ssub.s32 1, %s4
  %s7 = scalar_select 0, %s6, %s4
  $region1: #{tpu_custom_call.1} parent=0
    #allocation2 [shape = 'u8[32768]{0}', space=vmem, size = 0x8000, scoped, tag = 'input window, operand 0']
    #allocation3 [shape = 's32[2]{0}', space=sflag, size = 0x8, scoped, tag = 'scoped memory for tpu_custom_call.1']
    #allocation4 [shape = 's32[2]{0}', space=sflag, size = 0x8, scoped, tag = 'scoped memory for tpu_custom_call.1']
    #allocation5 [shape = 'u8[4096]{0}', space=vmem, size = 0x1000, scoped, tag = 'input window, operand 1']
    #allocation6 [shape = 's32[2]{0}', space=sflag, size = 0x8, scoped, tag = 'scoped memory for tpu_custom_call.1']
    #allocation7 [shape = 'u8[196608]{0}', space=vmem, size = 0x30000, scoped, tag = 'input window, operand 2, single buffered']
    #allocation8 [shape = 'u8[32768]{0}', space=vmem, size = 0x8000, scoped, tag = 'output window, operand 0']
    %8 = vsyncpa [#allocation3], 0
    %s9 = scalar_lea.sflag [#allocation3], 1
    %10 = vsyncpa %s9, 0
    %11 = vsyncpa [#allocation6], 0
    %s12 = scalar_lea.sflag [#allocation6], 1
    %13 = vsyncpa %s12, 0
    %14 = vsyncpa [#allocation4], 0
    %s15 = scalar_lea.sflag [#allocation4], 1
    %16 = vsyncpa %s15, 0
    loop: start=0, step=1, limit=4
    $region2: #{tpu_custom_call.1} parent=1 // loop_pre_header
      _
    $region3: #{tpu_custom_call.1} parent=1 // loop_header
      %s18 = sphi 0, %s22
      %p19 = scmp.ge.s32.totalorder %s18, 4
      %s28 = sphi 0, %s30
      %s31 = sphi 0, %s28
      %s32 = sphi 0, %s31
      %s48 = sphi 0, %s32
      %s54 = sphi 0, %s56
      %s57 = sphi 0, %s54
      %s58 = sphi 0, %s57
      %s74 = sphi 0, %s58
      %s78 = sphi 0, %s78
      %s80 = sphi 0, %s78
      %s81 = sphi 0, %s80
      %s95 = sphi 0, %s81
      %s101 = sphi 0, %s103
      %s104 = sphi 0, %s101
      %s105 = sphi 0, %s104
      %s121 = sphi 0, %s105
    $region4: #{tpu_custom_call.1} parent=1 // loop_header_branch
      %21 = sbr.rel (%p19) target = $region8
    $region5: #{tpu_custom_call.1} parent=1 // loop_body
      %s23 = ssub.s32 %s18, 1
      %s24 = ssub.s32 %s18, 2
      %s25 = sadd.s32 %s18, 1
      %s26 = ssub.s32 %s18, %s25
      %p27 = scmp.eq.s32.totalorder %s26, 0
      %s29 = sadd.s32 %s28, 1
      %s30 = scalar_select %p27, %s28, %s29
      %p33 = pneg %p27
      %p34 = scmp.eq.s32.totalorder %s18, 1
      %p35 = por %p33, %p34
      %p36 = scmp.ne.s32.totalorder %s28, %s31
      %p37 = scmp.eq.s32.totalorder %s18, 0
      %p38 = por %p36, %p37
      %p39 = scmp.ne.s32.totalorder %s28, %s31
      %p40 = scmp.eq.s32.totalorder %s23, 1
      %p41 = por %p39, %p40
      %p42 = scmp.ne.s32.totalorder %s31, %s32
      %p43 = scmp.eq.s32.totalorder %s23, 0
      %p44 = por %p42, %p43
      %p45 = scmp.ne.s32.totalorder %s31, %s32
      %p46 = scmp.eq.s32.totalorder %s24, 1
      %p47 = por %p45, %p46
      %p49 = scmp.ne.s32.totalorder %s32, %s48
      %p50 = scmp.eq.s32.totalorder %s24, 0
      %p51 = por %p49, %p50
      %s52 = ssub.s32 %s18, %s25
      %p53 = scmp.eq.s32.totalorder %s52, 0
      %s55 = sadd.s32 %s54, 1
      %s56 = scalar_select %p53, %s54, %s55
      %p59 = pneg %p53
      %p60 = scmp.eq.s32.totalorder %s18, 1
      %p61 = por %p59, %p60
      %p62 = scmp.ne.s32.totalorder %s54, %s57
      %p63 = scmp.eq.s32.totalorder %s18, 0
      %p64 = por %p62, %p63
      %p65 = scmp.ne.s32.totalorder %s54, %s57
      %p66 = scmp.eq.s32.totalorder %s23, 1
      %p67 = por %p65, %p66
      %p68 = scmp.ne.s32.totalorder %s57, %s58
      %p69 = scmp.eq.s32.totalorder %s23, 0
      %p70 = por %p68, %p69
      %p71 = scmp.ne.s32.totalorder %s57, %s58
      %p72 = scmp.eq.s32.totalorder %s24, 1
      %p73 = por %p71, %p72
      %p75 = scmp.ne.s32.totalorder %s58, %s74
      %p76 = scmp.eq.s32.totalorder %s24, 0
      %p77 = por %p75, %p76
      %s79 = sadd.s32 %s78, 1
      %p82 = scmp.eq.s32.totalorder %s18, 1
      %p83 = scmp.ne.s32.totalorder %s78, %s80
      %p84 = scmp.eq.s32.totalorder %s18, 0
      %p85 = por %p83, %p84
      %p86 = scmp.ne.s32.totalorder %s78, %s80
      %p87 = scmp.eq.s32.totalorder %s23, 1
      %p88 = por %p86, %p87
      %p89 = scmp.ne.s32.totalorder %s80, %s81
      %p90 = scmp.eq.s32.totalorder %s23, 0
      %p91 = por %p89, %p90
      %p92 = scmp.ne.s32.totalorder %s80, %s81
      %p93 = scmp.eq.s32.totalorder %s24, 1
      %p94 = por %p92, %p93
      %p96 = scmp.ne.s32.totalorder %s81, %s95
      %p97 = scmp.eq.s32.totalorder %s24, 0
      %p98 = por %p96, %p97
      %s99 = ssub.s32 %s18, %s25
      %p100 = scmp.eq.s32.totalorder %s99, 0
      %s102 = sadd.s32 %s101, 1
      %s103 = scalar_select %p100, %s101, %s102
      %p106 = pneg %p100
      %p107 = scmp.eq.s32.totalorder %s18, 1
      %p108 = por %p106, %p107
      %p109 = scmp.ne.s32.totalorder %s101, %s104
      %p110 = scmp.eq.s32.totalorder %s18, 0
      %p111 = por %p109, %p110
      %p112 = scmp.ne.s32.totalorder %s101, %s104
      %p113 = scmp.eq.s32.totalorder %s23, 1
      %p114 = por %p112, %p113
      %p115 = scmp.ne.s32.totalorder %s104, %s105
      %p116 = scmp.eq.s32.totalorder %s23, 0
      %p117 = por %p115, %p116
      %p118 = scmp.ne.s32.totalorder %s104, %s105
      %p119 = scmp.eq.s32.totalorder %s24, 1
      %p120 = por %p118, %p119
      %p122 = scmp.ne.s32.totalorder %s105, %s121
      %p123 = scmp.eq.s32.totalorder %s24, 0
      %p124 = por %p122, %p123
      %p125 = scmp.le.s32.totalorder 1, %s18
      %p126 = scmp.lt.s32.totalorder %s18, 3
      %p127 = pnand %p125, %p126
      %p128 = pneg %p127
      // Predicated region
      $region9: #{tpu_custom_call.1} parent=5 // pred_check
        _
      $region10: #{tpu_custom_call.1} parent=5 // pred_check_branch
        %130 = sbr.rel (%p127) target = $region12
      $region11: #{tpu_custom_call.1} parent=5 // pred_region
        %s131 = ssub.s32 %s18, 1
        // Predicated region
        $region13: #{tpu_custom_call.1} parent=11 // pred_check
          %p132 = pneg %p91
        $region14: #{tpu_custom_call.1} parent=11 // pred_check_branch
          %134 = sbr.rel (%p132) target = $region16
        $region15: #{tpu_custom_call.1} parent=11 // pred_region
          %136 = vsyncadd [#allocation6], 0
          %s137 = sshll.u32 %s2, 4
          %s138 = int_to_ptr.hbm [resolvable:$true] %s137
          %s139 = sshll.u32 [#allocation7], 4
          %s140 = int_to_ptr.vmem [resolvable:$true] %s139
          %145 = dma.hbm_to_vmem [thread:$0]  %s138, 6144, %s140, [#allocation6], 384, 384, 24
        $region16: #{tpu_custom_call.1} parent=11 // pred_fallthru
          _
      $region12: #{tpu_custom_call.1} parent=5 // pred_fallthru
        _
      %p146 = scmp.lt.s32.totalorder %s18, 2
      // Predicated region
      $region17: #{tpu_custom_call.1} parent=5 // pred_check
        %p147 = pneg %p146
      $region18: #{tpu_custom_call.1} parent=5 // pred_check_branch
        %149 = sbr.rel (%p147) target = $region20
      $region19: #{tpu_custom_call.1} parent=5 // pred_region
        // Predicated region
        $region21: #{tpu_custom_call.1} parent=19 // pred_check
          %p150 = pneg %p38
        $region22: #{tpu_custom_call.1} parent=19 // pred_check_branch
          %152 = sbr.rel (%p150) target = $region24
        $region23: #{tpu_custom_call.1} parent=19 // pred_region
          %s153 = sand.u32 %s28, 1
          %s154 = scalar_lea.sflag [#allocation3], %s153
          %s155 = sand.u32 %s28, 1
          %s156 = smul.addr %s155, 32
          %s157 = scalar_lea.vmem [#allocation2], %s156
          %s158 = smul.u32 4, %s18
          %160 = vsyncadd %s154, 0
          %s161 = smul.addr %s158, 8
          %s162 = scalar_lea.hbm %s0, %s161
          %s163 = sshll.u32 %s162, 4
          %s164 = int_to_ptr.hbm [resolvable:$true] %s163
          %s165 = sshll.u32 %s157, 4
          %s166 = int_to_ptr.vmem [resolvable:$true] %s165
          %171 = dma.hbm_to_vmem [thread:$0]  %s164, 512, %s166, %s154, 128, 128, 8
        $region24: #{tpu_custom_call.1} parent=19 // pred_fallthru
          _
        // Predicated region
        $region25: #{tpu_custom_call.1} parent=19 // pred_check
          %p172 = pneg %p64
        $region26: #{tpu_custom_call.1} parent=19 // pred_check_branch
          %174 = sbr.rel (%p172) target = $region28
        $region27: #{tpu_custom_call.1} parent=19 // pred_region
          %s175 = sand.u32 %s18, 1
          %s176 = scalar_lea.sflag [#allocation6], %s175
          %s177 = sand.u32 %s54, 1
          %s178 = smul.addr %s177, 4
          %s179 = scalar_lea.vmem [#allocation5], %s178
          %s180 = smul.u32 4, %s18
          %182 = vsyncadd %s176, 0
          %s183 = scalar_lea.hbm %s1, %s180
          %s184 = sshll.u32 %s183, 4
          %s185 = int_to_ptr.hbm [resolvable:$true] %s184
          %s186 = sshll.u32 %s179, 4
          %s187 = int_to_ptr.vmem [resolvable:$true] %s186
          %192 = dma.hbm_to_vmem [thread:$0]  %s185, 64, %s187, %s176, 16, 16, 1
        $region28: #{tpu_custom_call.1} parent=19 // pred_fallthru
          _
      $region20: #{tpu_custom_call.1} parent=5 // pred_fallthru
        _
      %p193 = scmp.le.s32.totalorder 1, %s18
      %p194 = scmp.lt.s32.totalorder %s18, 3
      %p195 = pnand %p193, %p194
      %p196 = pneg %p195
      // Predicated region
      $region29: #{tpu_custom_call.1} parent=5 // pred_check
        _
      $region30: #{tpu_custom_call.1} parent=5 // pred_check_branch
        %198 = sbr.rel (%p195) target = $region32
      $region31: #{tpu_custom_call.1} parent=5 // pred_region
        %s199 = ssub.s32 %s18, 1
        %s200 = sand.u32 %s31, 1
        %s201 = scalar_lea.sflag [#allocation3], %s200
        %s202 = sand.u32 %s31, 1
        %s203 = smul.addr %s202, 32
        %s204 = scalar_lea.vmem [#allocation2], %s203
        // Predicated region
        $region33: #{tpu_custom_call.1} parent=31 // pred_check
          %p205 = pneg %p44
        $region34: #{tpu_custom_call.1} parent=31 // pred_check_branch
          %207 = sbr.rel (%p205) target = $region36
        $region35: #{tpu_custom_call.1} parent=31 // pred_region
          %209 = dma.done %s201, 512
        $region36: #{tpu_custom_call.1} parent=31 // pred_fallthru
          _
        %s210 = sand.u32 %s23, 1
        %s211 = scalar_lea.sflag [#allocation6], %s210
        %s212 = sand.u32 %s57, 1
        %s213 = smul.addr %s212, 4
        %s214 = scalar_lea.vmem [#allocation5], %s213
        // Predicated region
        $region37: #{tpu_custom_call.1} parent=31 // pred_check
          %p215 = pneg %p70
        $region38: #{tpu_custom_call.1} parent=31 // pred_check_branch
          %217 = sbr.rel (%p215) target = $region40
        $region39: #{tpu_custom_call.1} parent=31 // pred_region
          %219 = dma.done %s211, 64
        $region40: #{tpu_custom_call.1} parent=31 // pred_fallthru
          _
        // Predicated region
        $region41: #{tpu_custom_call.1} parent=31 // pred_check
          %p220 = pneg %p91
        $region42: #{tpu_custom_call.1} parent=31 // pred_check_branch
          %222 = sbr.rel (%p220) target = $region44
        $region43: #{tpu_custom_call.1} parent=31 // pred_region
          %224 = dma.done [#allocation6], 6144
        $region44: #{tpu_custom_call.1} parent=31 // pred_fallthru
          _
        %s225 = sand.u32 %s31, 1
        %s226 = scalar_lea.sflag [#allocation3], %s225
        %s227 = sand.u32 %s31, 1
        %s228 = smul.addr %s227, 32
        %s229 = scalar_lea.vmem [#allocation2], %s228
        %p230 = pneg %p44
        %p231 = pneg %p41
        %s232 = sand.u32 %s23, 1
        %s233 = scalar_lea.sflag [#allocation6], %s232
        %s234 = sand.u32 %s57, 1
        %s235 = smul.addr %s234, 4
        %s236 = scalar_lea.vmem [#allocation5], %s235
        %p237 = pneg %p70
        %p238 = pneg %p67
        %p239 = pneg %p91
        %p240 = pneg %p88
        %p241 = pneg %p117
        %p242 = pneg %p114
        %s243 = sand.u32 %s104, 1
        %s244 = scalar_lea.sflag [#allocation4], %s243
        %s245 = sand.u32 %s104, 1
        %s246 = smul.addr %s245, 32
        %s247 = scalar_lea.vmem [#allocation8], %s246
        %s248 = smul.u32 4, %s23
        %s249 = smul.u32 4, %s23
        %s250 = smul.u32 4, %s23
        %v251 = vld [vmem:[%s204] sm:$0xff]
        %v252 = vld [vmem:[%s204 + $0x8] sm:$0xff]
        %v253 = vld [vmem:[%s204 + $0x10] sm:$0xff]
        %v254 = vld [vmem:[%s204 + $0x18] sm:$0xff]
        %v255 = vld [vmem:[#allocation7] sm:$0xff]
        %v256 = vld [vmem:[#allocation7 + $0x8] sm:$0xff]
        %v257 = vld [vmem:[#allocation7 + $0x10] sm:$0xff]
        %v258 = vld [vmem:[#allocation7 + $0x18] sm:$0xff]
        %v259 = vld [vmem:[#allocation7 + $0x20] sm:$0xff]
        %v260 = vld [vmem:[#allocation7 + $0x28] sm:$0xff]
        %v261 = vld [vmem:[#allocation7 + $0x30] sm:$0xff]
        %v262 = vld [vmem:[#allocation7 + $0x38] sm:$0xff]
        %v263 = vld [vmem:[#allocation7 + $0x40] sm:$0xff]
        %v264 = vld [vmem:[#allocation7 + $0x48] sm:$0xff]
        %v265 = vld [vmem:[#allocation7 + $0x50] sm:$0xff]
        %v266 = vld [vmem:[#allocation7 + $0x58] sm:$0xff]
        %v267 = vld [vmem:[#allocation7 + $0x60] sm:$0xff]
        %v268 = vld [vmem:[#allocation7 + $0x68] sm:$0xff]
        %v269 = vld [vmem:[#allocation7 + $0x70] sm:$0xff]
        %v270 = vld [vmem:[#allocation7 + $0x78] sm:$0xff]
        %v271 = vld [vmem:[#allocation7 + $0x80] sm:$0xff]
        %v272 = vld [vmem:[#allocation7 + $0x88] sm:$0xff]
        %v273 = vld [vmem:[#allocation7 + $0x90] sm:$0xff]
        %v274 = vld [vmem:[#allocation7 + $0x98] sm:$0xff]
        %v275 = vld [vmem:[#allocation7 + $0xa0] sm:$0xff]
        %v276 = vld [vmem:[#allocation7 + $0xa8] sm:$0xff]
        %v277 = vld [vmem:[#allocation7 + $0xb0] sm:$0xff]
        %v278 = vld [vmem:[#allocation7 + $0xb8] sm:$0xff]
        %v279 = vld [vmem:[#allocation7 + $0xc0] sm:$0xff]
        %v280 = vld [vmem:[#allocation7 + $0xc8] sm:$0xff]
        %v281 = vld [vmem:[#allocation7 + $0xd0] sm:$0xff]
        %v282 = vld [vmem:[#allocation7 + $0xd8] sm:$0xff]
        %v283 = vld [vmem:[#allocation7 + $0xe0] sm:$0xff]
        %v284 = vld [vmem:[#allocation7 + $0xe8] sm:$0xff]
        %v285 = vld [vmem:[#allocation7 + $0xf0] sm:$0xff]
        %v286 = vld [vmem:[#allocation7 + $0xf8] sm:$0xff]
        %v287 = vld [vmem:[#allocation7 + $0x100] sm:$0xff]
        %v288 = vld [vmem:[#allocation7 + $0x108] sm:$0xff]
        %v289 = vld [vmem:[#allocation7 + $0x110] sm:$0xff]
        %v290 = vld [vmem:[#allocation7 + $0x118] sm:$0xff]
        %v291 = vld [vmem:[#allocation7 + $0x120] sm:$0xff]
        %v292 = vld [vmem:[#allocation7 + $0x128] sm:$0xff]
        %v293 = vld [vmem:[#allocation7 + $0x130] sm:$0xff]
        %v294 = vld [vmem:[#allocation7 + $0x138] sm:$0xff]
        %v295 = vld [vmem:[#allocation7 + $0x140] sm:$0xff]
        %v296 = vld [vmem:[#allocation7 + $0x148] sm:$0xff]
        %v297 = vld [vmem:[#allocation7 + $0x150] sm:$0xff]
        %v298 = vld [vmem:[#allocation7 + $0x158] sm:$0xff]
        %v299 = vld [vmem:[#allocation7 + $0x160] sm:$0xff]
        %v300 = vld [vmem:[#allocation7 + $0x168] sm:$0xff]
        %v301 = vld [vmem:[#allocation7 + $0x170] sm:$0xff]
        %v302 = vld [vmem:[#allocation7 + $0x178] sm:$0xff]
        %303 = vmatpush.msra.mxu0 %v300
        %304 = vmatpush.msra.mxu0 %v297
        %305 = vmatpush.msra.mxu0 %v294
        %306 = vmatpush.msra.mxu0 %v291
        %307 = vmatpush.msra.mxu0 %v288
        %308 = vmatpush.msra.mxu0 %v285
        %309 = vmatpush.msra.mxu0 %v282
        %310 = vmatpush.msra.mxu0 %v279
        %311 = vmatpush.msra.mxu0 %v276
        %312 = vmatpush.msra.mxu0 %v273
        %313 = vmatpush.msra.mxu0 %v270
        %314 = vmatpush.msra.mxu0 %v267
        %315 = vmatpush.msra.mxu0 %v264
        %316 = vmatpush.msra.mxu0 %v261
        %317 = vmatpush.msra.mxu0 %v258
        %318 = vmatpush.msra.mxu0 %v255
        %319 = vmatmul.f32.gmra.mxu0 %v251
        %v320 = vpop.f32.mrf.mxu0
        %v321 = vadd.f32 0.0, %v320
        %322 = vmatmul.f32.gmra.mxu0 %v252
        %v323 = vpop.f32.mrf.mxu0
        %v324 = vadd.f32 0.0, %v323
        %325 = vmatmul.f32.gmra.mxu0 %v253
        %v326 = vpop.f32.mrf.mxu0
        %v327 = vadd.f32 0.0, %v326
        %328 = vmatmul.f32.gmra.mxu0 %v254
        %v329 = vpop.f32.mrf.mxu0
        %v330 = vadd.f32 0.0, %v329
        %331 = vdwg.mxu0
        %332 = vmatpush.msra.mxu0 %v301
        %333 = vmatpush.msra.mxu0 %v298
        %334 = vmatpush.msra.mxu0 %v295
        %335 = vmatpush.msra.mxu0 %v292
        %336 = vmatpush.msra.mxu0 %v289
        %337 = vmatpush.msra.mxu0 %v286
        %338 = vmatpush.msra.mxu0 %v283
        %339 = vmatpush.msra.mxu0 %v280
        %340 = vmatpush.msra.mxu0 %v277
        %341 = vmatpush.msra.mxu0 %v274
        %342 = vmatpush.msra.mxu0 %v271
        %343 = vmatpush.msra.mxu0 %v268
        %344 = vmatpush.msra.mxu0 %v265
        %345 = vmatpush.msra.mxu0 %v262
        %346 = vmatpush.msra.mxu0 %v259
        %347 = vmatpush.msra.mxu0 %v256
        %348 = vmatmul.f32.gmra.mxu0 %v251
        %v349 = vpop.f32.mrf.mxu0
        %v350 = vadd.f32 0.0, %v349
        %351 = vmatmul.f32.gmra.mxu0 %v252
        %v352 = vpop.f32.mrf.mxu0
        %v353 = vadd.f32 0.0, %v352
        %354 = vmatmul.f32.gmra.mxu0 %v253
        %v355 = vpop.f32.mrf.mxu0
        %v356 = vadd.f32 0.0, %v355
        %357 = vmatmul.f32.gmra.mxu0 %v254
        %v358 = vpop.f32.mrf.mxu0
        %v359 = vadd.f32 0.0, %v358
        %360 = vdwg.mxu0
        %361 = vmatpush.msra.mxu0 %v302
        %362 = vmatpush.msra.mxu0 %v299
        %363 = vmatpush.msra.mxu0 %v296
        %364 = vmatpush.msra.mxu0 %v293
        %365 = vmatpush.msra.mxu0 %v290
        %366 = vmatpush.msra.mxu0 %v287
        %367 = vmatpush.msra.mxu0 %v284
        %368 = vmatpush.msra.mxu0 %v281
        %369 = vmatpush.msra.mxu0 %v278
        %370 = vmatpush.msra.mxu0 %v275
        %371 = vmatpush.msra.mxu0 %v272
        %372 = vmatpush.msra.mxu0 %v269
        %373 = vmatpush.msra.mxu0 %v266
        %374 = vmatpush.msra.mxu0 %v263
        %375 = vmatpush.msra.mxu0 %v260
        %376 = vmatpush.msra.mxu0 %v257
        %377 = vmatmul.f32.gmra.mxu0 %v251
        %v378 = vpop.f32.mrf.mxu0
        %v379 = vadd.f32 0.0, %v378
        %380 = vmatmul.f32.gmra.mxu0 %v252
        %v381 = vpop.f32.mrf.mxu0
        %v382 = vadd.f32 0.0, %v381
        %383 = vmatmul.f32.gmra.mxu0 %v253
        %v384 = vpop.f32.mrf.mxu0
        %v385 = vadd.f32 0.0, %v384
        %386 = vmatmul.f32.gmra.mxu0 %v254
        %v387 = vpop.f32.mrf.mxu0
        %v388 = vadd.f32 0.0, %v387
        %389 = vdwg.mxu0
        %v390 = vmul.f32 %v321, 0.088388346
        %v391 = vmul.f32 %v324, 0.088388346
        %v392 = vmul.f32 %v327, 0.088388346
        %v393 = vmul.f32 %v330, 0.088388346
        %394 = vmatpush.xpose.msra.mxu0 0.0
        %395 = vmatpush.xpose.msra.mxu0 0.0
        %396 = vmatpush.xpose.msra.mxu0 0.0
        %397 = vmatpush.xpose.msra.mxu0 0.0
        %398 = vmatpush.xpose.msra.mxu0 0.0
        %399 = vmatpush.xpose.msra.mxu0 0.0
        %400 = vmatpush.xpose.msra.mxu0 0.0
        %401 = vmatpush.xpose.msra.mxu0 0.0
        %402 = vmatpush.xpose.msra.mxu0 0.0
        %403 = vmatpush.xpose.msra.mxu0 0.0
        %404 = vmatpush.xpose.msra.mxu0 0.0
        %405 = vmatpush.xpose.msra.mxu0 0.0
        %406 = vmatpush.xpose.msra.mxu0 0.0
        %407 = vmatpush.xpose.msra.mxu0 0.0
        %408 = vmatpush.xpose.msra.mxu0 0.0
        %409 = vmatpush.xpose.msra.mxu0 %v350
        %410 = vmatmul.f32.gmra.mxu0 %v390
        %v411 = vpop.f32.mrf.mxu0
        %v412 = vadd.f32 0.0, %v411
        %413 = vdwg.mxu0
        %414 = vmatpush.xpose.msra.mxu0 0.0
        %415 = vmatpush.xpose.msra.mxu0 0.0
        %416 = vmatpush.xpose.msra.mxu0 0.0
        %417 = vmatpush.xpose.msra.mxu0 0.0
        %418 = vmatpush.xpose.msra.mxu0 0.0
        %419 = vmatpush.xpose.msra.mxu0 0.0
        %420 = vmatpush.xpose.msra.mxu0 0.0
        %421 = vmatpush.xpose.msra.mxu0 0.0
        %422 = vmatpush.xpose.msra.mxu0 0.0
        %423 = vmatpush.xpose.msra.mxu0 0.0
        %424 = vmatpush.xpose.msra.mxu0 0.0
        %425 = vmatpush.xpose.msra.mxu0 0.0
        %426 = vmatpush.xpose.msra.mxu0 0.0
        %427 = vmatpush.xpose.msra.mxu0 0.0
        %428 = vmatpush.xpose.msra.mxu0 0.0
        %429 = vmatpush.xpose.msra.mxu0 %v353
        %430 = vmatmul.f32.gmra.mxu0 %v391
        %v431 = vpop.f32.mrf.mxu0
        %v432 = vadd.f32 0.0, %v431
        %433 = vdwg.mxu0
        %434 = vmatpush.xpose.msra.mxu0 0.0
        %435 = vmatpush.xpose.msra.mxu0 0.0
        %436 = vmatpush.xpose.msra.mxu0 0.0
        %437 = vmatpush.xpose.msra.mxu0 0.0
        %438 = vmatpush.xpose.msra.mxu0 0.0
        %439 = vmatpush.xpose.msra.mxu0 0.0
        %440 = vmatpush.xpose.msra.mxu0 0.0
        %441 = vmatpush.xpose.msra.mxu0 0.0
        %442 = vmatpush.xpose.msra.mxu0 0.0
        %443 = vmatpush.xpose.msra.mxu0 0.0
        %444 = vmatpush.xpose.msra.mxu0 0.0
        %445 = vmatpush.xpose.msra.mxu0 0.0
        %446 = vmatpush.xpose.msra.mxu0 0.0
        %447 = vmatpush.xpose.msra.mxu0 0.0
        %448 = vmatpush.xpose.msra.mxu0 0.0
        %449 = vmatpush.xpose.msra.mxu0 %v356
        %450 = vmatmul.f32.gmra.mxu0 %v392
        %v451 = vpop.f32.mrf.mxu0
        %v452 = vadd.f32 0.0, %v451
        %453 = vdwg.mxu0
        %454 = vmatpush.xpose.msra.mxu0 0.0
        %455 = vmatpush.xpose.msra.mxu0 0.0
        %456 = vmatpush.xpose.msra.mxu0 0.0
        %457 = vmatpush.xpose.msra.mxu0 0.0
        %458 = vmatpush.xpose.msra.mxu0 0.0
        %459 = vmatpush.xpose.msra.mxu0 0.0
        %460 = vmatpush.xpose.msra.mxu0 0.0
        %461 = vmatpush.xpose.msra.mxu0 0.0
        %462 = vmatpush.xpose.msra.mxu0 0.0
        %463 = vmatpush.xpose.msra.mxu0 0.0
        %464 = vmatpush.xpose.msra.mxu0 0.0
        %465 = vmatpush.xpose.msra.mxu0 0.0
        %466 = vmatpush.xpose.msra.mxu0 0.0
        %467 = vmatpush.xpose.msra.mxu0 0.0
        %468 = vmatpush.xpose.msra.mxu0 0.0
        %469 = vmatpush.xpose.msra.mxu0 %v359
        %470 = vmatmul.f32.gmra.mxu0 %v393
        %v471 = vpop.f32.mrf.mxu0
        %v472 = vadd.f32 0.0, %v471
        %473 = vdwg.mxu0
        %v474 = vld [vmem:[%s214] sm:$0x1]
        %v475 = vld [vmem:[%s214 + $0x1] sm:$0x1]
        %v476 = vld [vmem:[%s214 + $0x2] sm:$0x1]
        %v477 = vld [vmem:[%s214 + $0x3] sm:$0x1]
        %vm478 = vcmp.ne.s32.totalorder %v474, 0
        %vm479 = vcmp.ne.s32.totalorder %v475, 0
        %vm480 = vcmp.ne.s32.totalorder %v476, 0
        %vm481 = vcmp.ne.s32.totalorder %v477, 0
        %v482 = vsel %vm478, 1, 0
        %v483 = vsel %vm479, 1, 0
        %v484 = vsel %vm480, 1, 0
        %v485 = vsel %vm481, 1, 0
        %v486 = vperm.slane %v482, 0
        %v487 = vperm.slane %v483, 0
        %v488 = vperm.slane %v484, 0
        %v489 = vperm.slane %v485, 0
        %vm490 = vcmp.eq.s32.totalorder %v486, 1
        %vm491 = vcmp.eq.s32.totalorder %v487, 1
        %vm492 = vcmp.eq.s32.totalorder %v488, 1
        %vm493 = vcmp.eq.s32.totalorder %v489, 1
        %v494 = vsel %vm490, -1e+09, %v412
        %v495 = vsel %vm491, -1e+09, %v432
        %v496 = vsel %vm492, -1e+09, %v452
        %v497 = vsel %vm493, -1e+09, %v472
        %vm498 = vcmask 64512
        %v499 = vsel %vm498, %v494, -inf
        %500 = vmax.xlane.f32.xlu0 %v499
        %v501 = vpop.xlane.xlu0 %500
        %v502 = vsel %vm498, %v495, -inf
        %503 = vmax.xlane.f32.xlu0 %v502
        %v504 = vpop.xlane.xlu0 %503
        %v505 = vsel %vm498, %v496, -inf
        %506 = vmax.xlane.f32.xlu0 %v505
        %v507 = vpop.xlane.xlu0 %506
        %v508 = vsel %vm498, %v497, -inf
        %509 = vmax.xlane.f32.xlu0 %v508
        %v510 = vpop.xlane.xlu0 %509
        %v511 = vsub.f32 %v494, %v501
        %v512 = vsub.f32 %v495, %v504
        %v513 = vsub.f32 %v496, %v507
        %v514 = vsub.f32 %v497, %v510
        %v515 = vmul.f32 %v511, 1.442695
        %v516 = vpow.pop %v515
        %v517 = vmul.f32 %v512, 1.442695
        %v518 = vpow.pop %v517
        %v519 = vmul.f32 %v513, 1.442695
        %v520 = vpow.pop %v519
        %v521 = vmul.f32 %v514, 1.442695
        %v522 = vpow.pop %v521
        %v523 = vsel %vm498, %v516, 0.0
        %524 = vadd.xlane.f32.xlu0 %v523
        %v525 = vpop.xlane.xlu0 %524
        %v526 = vsel %vm498, %v518, 0.0
        %527 = vadd.xlane.f32.xlu0 %v526
        %v528 = vpop.xlane.xlu0 %527
        %v529 = vsel %vm498, %v520, 0.0
        %530 = vadd.xlane.f32.xlu0 %v529
        %v531 = vpop.xlane.xlu0 %530
        %v532 = vsel %vm498, %v522, 0.0
        %533 = vadd.xlane.f32.xlu0 %v532
        %v534 = vpop.xlane.xlu0 %533
        %v535 = vrcp.pop %v525
        %v536 = vrcp.pop %v528
        %v537 = vrcp.pop %v531
        %v538 = vrcp.pop %v534
        %v539 = vmul.f32 %v516, %v535
        %v540 = vmul.f32 %v518, %v536
        %v541 = vmul.f32 %v520, %v537
        %v542 = vmul.f32 %v522, %v538
        %v544 = vsel %vm498, %v539, 0
        %546 = vmatpush.msra.mxu0 0.0
        %547 = vmatpush.msra.mxu0 0.0
        %548 = vmatpush.msra.mxu0 0.0
        %549 = vmatpush.msra.mxu0 0.0
        %550 = vmatpush.msra.mxu0 0.0
        %551 = vmatpush.msra.mxu0 0.0
        %552 = vmatpush.msra.mxu0 0.0
        %553 = vmatpush.msra.mxu0 0.0
        %554 = vmatpush.msra.mxu0 0.0
        %555 = vmatpush.msra.mxu0 0.0
        %556 = vmatpush.msra.mxu0 0.0
        %557 = vmatpush.msra.mxu0 0.0
        %558 = vmatpush.msra.mxu0 0.0
        %559 = vmatpush.msra.mxu0 0.0
        %560 = vmatpush.msra.mxu0 0.0
        %561 = vmatpush.msra.mxu0 %v379
        %562 = vmatmul.f32.gmra.mxu0 %v544
        %v563 = vpop.f32.mrf.mxu0
        %v564 = vadd.f32 0.0, %v563
        %565 = vdwg.mxu0
        %v567 = vsel %vm498, %v540, 0
        %569 = vmatpush.msra.mxu0 0.0
        %570 = vmatpush.msra.mxu0 0.0
        %571 = vmatpush.msra.mxu0 0.0
        %572 = vmatpush.msra.mxu0 0.0
        %573 = vmatpush.msra.mxu0 0.0
        %574 = vmatpush.msra.mxu0 0.0
        %575 = vmatpush.msra.mxu0 0.0
        %576 = vmatpush.msra.mxu0 0.0
        %577 = vmatpush.msra.mxu0 0.0
        %578 = vmatpush.msra.mxu0 0.0
        %579 = vmatpush.msra.mxu0 0.0
        %580 = vmatpush.msra.mxu0 0.0
        %581 = vmatpush.msra.mxu0 0.0
        %582 = vmatpush.msra.mxu0 0.0
        %583 = vmatpush.msra.mxu0 0.0
        %584 = vmatpush.msra.mxu0 %v382
        %585 = vmatmul.f32.gmra.mxu0 %v567
        %v586 = vpop.f32.mrf.mxu0
        %v587 = vadd.f32 0.0, %v586
        %588 = vdwg.mxu0
        %v590 = vsel %vm498, %v541, 0
        %592 = vmatpush.msra.mxu0 0.0
        %593 = vmatpush.msra.mxu0 0.0
        %594 = vmatpush.msra.mxu0 0.0
        %595 = vmatpush.msra.mxu0 0.0
        %596 = vmatpush.msra.mxu0 0.0
        %597 = vmatpush.msra.mxu0 0.0
        %598 = vmatpush.msra.mxu0 0.0
        %599 = vmatpush.msra.mxu0 0.0
        %600 = vmatpush.msra.mxu0 0.0
        %601 = vmatpush.msra.mxu0 0.0
        %602 = vmatpush.msra.mxu0 0.0
        %603 = vmatpush.msra.mxu0 0.0
        %604 = vmatpush.msra.mxu0 0.0
        %605 = vmatpush.msra.mxu0 0.0
        %606 = vmatpush.msra.mxu0 0.0
        %607 = vmatpush.msra.mxu0 %v385
        %608 = vmatmul.f32.gmra.mxu0 %v590
        %v609 = vpop.f32.mrf.mxu0
        %v610 = vadd.f32 0.0, %v609
        %611 = vdwg.mxu0
        %v613 = vsel %vm498, %v542, 0
        %615 = vmatpush.msra.mxu0 0.0
        %616 = vmatpush.msra.mxu0 0.0
        %617 = vmatpush.msra.mxu0 0.0
        %618 = vmatpush.msra.mxu0 0.0
        %619 = vmatpush.msra.mxu0 0.0
        %620 = vmatpush.msra.mxu0 0.0
        %621 = vmatpush.msra.mxu0 0.0
        %622 = vmatpush.msra.mxu0 0.0
        %623 = vmatpush.msra.mxu0 0.0
        %624 = vmatpush.msra.mxu0 0.0
        %625 = vmatpush.msra.mxu0 0.0
        %626 = vmatpush.msra.mxu0 0.0
        %627 = vmatpush.msra.mxu0 0.0
        %628 = vmatpush.msra.mxu0 0.0
        %629 = vmatpush.msra.mxu0 0.0
        %630 = vmatpush.msra.mxu0 %v388
        %631 = vmatmul.f32.gmra.mxu0 %v613
        %v632 = vpop.f32.mrf.mxu0
        %v633 = vadd.f32 0.0, %v632
        %634 = vdwg.mxu0
        %635 = vst [vmem:[%s247] sm:$0xff] %v564
        %636 = vst [vmem:[%s247 + $0x8] sm:$0xff] %v587
        %637 = vst [vmem:[%s247 + $0x10] sm:$0xff] %v610
        %638 = vst [vmem:[%s247 + $0x18] sm:$0xff] %v633
        %s639 = sand.u32 %s104, 1
        %s640 = scalar_lea.sflag [#allocation4], %s639
        %s641 = sand.u32 %s104, 1
        %s642 = smul.addr %s641, 32
        %s643 = scalar_lea.vmem [#allocation8], %s642
        // Predicated region
        $region45: #{tpu_custom_call.1} parent=31 // pred_check
          %p644 = pneg %p114
        $region46: #{tpu_custom_call.1} parent=31 // pred_check_branch
          %646 = sbr.rel (%p644) target = $region48
        $region47: #{tpu_custom_call.1} parent=31 // pred_region
          %s647 = smul.u32 4, %s23
          %649 = vsyncadd %s640, 0
          %s650 = smul.addr %s647, 8
          %s651 = scalar_lea.hbm %s3, %s650
          %s652 = sshll.u32 %s643, 4
          %s653 = int_to_ptr.vmem [resolvable:$true] %s652
          %s654 = sshll.u32 %s651, 4
          %s655 = int_to_ptr.hbm [resolvable:$true] %s654
          %660 = dma.vmem_to_hbm [thread:$0]  %s653, 512, %s655, %s640, 128, 128, 8
        $region48: #{tpu_custom_call.1} parent=31 // pred_fallthru
          _
      $region32: #{tpu_custom_call.1} parent=5 // pred_fallthru
        _
      %p661 = scmp.le.s32.totalorder 2, %s18
      // Predicated region
      $region49: #{tpu_custom_call.1} parent=5 // pred_check
        %p662 = pneg %p661
      $region50: #{tpu_custom_call.1} parent=5 // pred_check_branch
        %664 = sbr.rel (%p662) target = $region52
      $region51: #{tpu_custom_call.1} parent=5 // pred_region
        %s665 = ssub.s32 %s18, 2
        // Predicated region
        $region53: #{tpu_custom_call.1} parent=51 // pred_check
          %p666 = pneg %p120
        $region54: #{tpu_custom_call.1} parent=51 // pred_check_branch
          %668 = sbr.rel (%p666) target = $region56
        $region55: #{tpu_custom_call.1} parent=51 // pred_region
          %s669 = sand.u32 %s105, 1
          %s670 = scalar_lea.sflag [#allocation4], %s669
          %s671 = sand.u32 %s105, 1
          %s672 = smul.addr %s671, 32
          %s673 = scalar_lea.vmem [#allocation8], %s672
          %675 = dma.done %s670, 512
        $region56: #{tpu_custom_call.1} parent=51 // pred_fallthru
          _
      $region52: #{tpu_custom_call.1} parent=5 // pred_fallthru
        _
    $region6: #{tpu_custom_call.1} parent=1 // loop_footer
      %s22 = sadd.s32 1, %s18
    $region7: #{tpu_custom_call.1} parent=1 // loop_footer_branch
      %17 = sbr.rel target = $region3
    $region8: #{tpu_custom_call.1} parent=1 // loop_exit
      _
    %676 = vsyncpa [#allocation3], 1
    %s677 = scalar_lea.sflag [#allocation3], 1
    %678 = vsyncpa %s677, 1
    %679 = vsyncpa [#allocation6], 1
    %s680 = scalar_lea.sflag [#allocation6], 1
    %681 = vsyncpa %s680, 1
    %682 = vsyncpa [#allocation4], 1
    %s683 = scalar_lea.sflag [#allocation4], 1
    %684 = vsyncpa %s683, 1

</llo_original>
